<compile_context>
chip_gen: v6e
topology: v6e:2x2x1
jax: 0.10.0
libtpu: 0.0.40
codegen_flags: <defaults>
</compile_context>

<pallas_src>
import functools
import math

import jax
import jax.numpy as jnp
from jax.experimental import pallas as pl
from jax.experimental.pallas import tpu as pltpu


def _fixed_embedding_kernel(idx_ref, fm_ref, phase_ref, o_ref, *, tpr):
    # idx_ref  : (tile_r, tpr)    int32   -- tpr consecutive token indices per row
    # fm_ref   : (tpr, w_pack)    float32 -- row g = freq row masked to lanes of group g
    # phase_ref: (1, w_pack)      float32 -- (lane % 2) * pi/2  (cos(x) = sin(x + pi/2))
    # o_ref    : (tile_r, w_pack) float32 -- packed embeddings (lane dense)
    idx = idx_ref[...].astype(jnp.float32)                      # (tile_r, tpr), exact for small c_in
    angle = phase_ref[...] + idx[:, 0:1] * fm_ref[0:1, :]       # (tile_r, w_pack)
    for g in range(1, tpr):                                     # tpr is a small static constant
        angle = angle + idx[:, g:g + 1] * fm_ref[g:g + 1, :]
    o_ref[...] = jnp.sin(angle)                                 # single transcendental per element


def build_fixed_weight(c_in, d_model):
    """Deterministic sinusoidal table, matching FixedEmbedding.__init__ (reference only)."""
    position = jnp.arange(c_in, dtype=jnp.float32)[:, None]              # (c_in, 1)
    div_term = jnp.exp(
        jnp.arange(0, d_model, 2, dtype=jnp.float32)
        * -(math.log(10000.0) / d_model))                                # (d_model/2,)
    w = jnp.zeros((c_in, d_model), dtype=jnp.float32)
    w = w.at[:, 0::2].set(jnp.sin(position * div_term))
    w = w.at[:, 1::2].set(jnp.cos(position * div_term))
    return w


def fixed_embedding(x, d_model, *, tile_r_max=2048):
    """x: (B, L) integer indices -> (B, L, d_model) float32 sinusoidal embeddings."""
    assert d_model % 2 == 0, "FixedEmbedding requires an even d_model"
    B, L = x.shape
    N = B * L

    # How many tokens fit in one 128-lane row.
    if d_model <= 128 and 128 % d_model == 0:
        tpr = 128 // d_model
    else:
        tpr = 1                 # fallback: still correct, stores may be masked
    w_pack = tpr * d_model

    # Host-precomputed aux rows (tiny, constant):
    #   freq_row[c] = div_term[(c % d_model) // 2]
    #   fm[g, c]    = freq_row[c] if c // d_model == g else 0
    #   phase[c]    = (c % 2) * pi/2        (even lane -> sin, odd lane -> cos)
    div_term = jnp.exp(
        jnp.arange(0, d_model, 2, dtype=jnp.float32)
        * -(math.log(10000.0) / d_model))                                # (d_model/2,)
    freq_row = jnp.tile(jnp.repeat(div_term, 2), tpr)                    # (w_pack,)
    lane = jnp.arange(w_pack, dtype=jnp.int32)
    group_mask = (lane[None, :] // d_model
                  == jnp.arange(tpr, dtype=jnp.int32)[:, None]).astype(jnp.float32)
    fm = freq_row[None, :] * group_mask                                  # (tpr, w_pack)
    phase_row = ((lane % 2).astype(jnp.float32) * (math.pi / 2.0)).reshape(1, w_pack)

    # Pack tokens: row r holds tokens [r*tpr, (r+1)*tpr).  Only pad N up to a
    # multiple of tpr; the row count is NOT padded to a multiple of tile_r.
    idx_flat = x.reshape(N).astype(jnp.int32)
    n_tok = ((N + tpr - 1) // tpr) * tpr
    if n_tok != N:
        idx_flat = jnp.pad(idx_flat, (0, n_tok - N))   # padded tokens use index 0, sliced off below
    rows = n_tok // tpr
    idx_packed = idx_flat.reshape(rows, tpr)

    tile_r = min(rows, tile_r_max)                      # 2048x128xf32 block = 1 MiB, 2 MiB double-buffered
    grid = (pl.cdiv(rows, tile_r),)                     # Pallas masks the partial last block

    out_packed = pl.pallas_call(
        functools.partial(_fixed_embedding_kernel, tpr=tpr),
        out_shape=jax.ShapeDtypeStruct((rows, w_pack), jnp.float32),
        grid=grid,
        in_specs=[
            pl.BlockSpec((tile_r, tpr), lambda i: (i, 0)),     # token indices
            pl.BlockSpec((tpr, w_pack), lambda i: (0, 0)),     # masked freq table (VMEM resident)
            pl.BlockSpec((1, w_pack), lambda i: (0, 0)),       # parity phase row (VMEM resident)
        ],
        out_specs=pl.BlockSpec((tile_r, w_pack), lambda i: (i, 0)),
        compiler_params=pltpu.CompilerParams(
            dimension_semantics=("parallel",),                 # shard tiles across TCs on v7x
        ),
        cost_estimate=pl.CostEstimate(
            flops=2 * tpr * rows * w_pack,
            transcendentals=rows * w_pack,
            bytes_accessed=rows * w_pack * 4 + rows * tpr * 4 + (tpr + 1) * w_pack * 4,
        ),
    )(idx_packed, fm, phase_row)

    # Packed layout is row-major contiguous -> reshape to (n_tok, d_model) is free.
    out_flat = out_packed.reshape(n_tok, d_model)
    if n_tok != N:
        out_flat = out_flat[:N]
    return out_flat.reshape(B, L, d_model)


if __name__ == "__main__":
    c_in, d_model = 13, 32     # e.g. month-of-year embedding
    w_ref = build_fixed_weight(c_in, d_model)

    key = jax.random.PRNGKey(0)
    k1, k2, k3 = jax.random.split(key, 3)

    # Small case: single grid step, N % tpr == 0 -> no padding, no output slice.
    B, L = 2, 8
    x = jax.random.randint(k1, (B, L), 0, c_in, dtype=jnp.int32)
    out = jax.block_until_ready(fixed_embedding(x, d_model))
    ref = w_ref[x]
    assert out.shape == (B, L, d_model), out.shape
    assert out.dtype == jnp.float32, out.dtype
    assert jnp.allclose(out, ref, atol=1e-5, rtol=1e-5), "mismatch (small)"

    # Ragged token count: N % tpr != 0 -> token padding + final slice path.
    B2, L2 = 1, 9
    x2 = jax.random.randint(k2, (B2, L2), 0, c_in, dtype=jnp.int32)
    out2 = jax.block_until_ready(fixed_embedding(x2, d_model))
    assert out2.shape == (B2, L2, d_model), out2.shape
    assert jnp.allclose(out2, w_ref[x2], atol=1e-5, rtol=1e-5), "mismatch (ragged)"

    # Multi-tile grid with a partial (masked) last output block: rows = 2100 > tile_r = 2048.
    B3, L3 = 2, 4200
    x3 = jax.random.randint(k3, (B3, L3), 0, c_in, dtype=jnp.int32)
    out3 = jax.block_until_ready(fixed_embedding(x3, d_model))
    assert out3.shape == (B3, L3, d_model), out3.shape
    assert jnp.allclose(out3, w_ref[x3], atol=1e-5, rtol=1e-5), "mismatch (multi-tile)"

    print("KERNEL_OK")
</pallas_src>

<mosaic_0001>
module attributes {stable_mosaic.version = 11 : i64} {
  func.func @_fixed_embedding_kernel(%arg0: i32, %arg1: memref<4x4xi32, #tpu.memory_space<vmem>>, %arg2: memref<4x128xf32, #tpu.memory_space<vmem>>, %arg3: memref<1x128xf32, #tpu.memory_space<vmem>>, %arg4: memref<4x128xf32, #tpu.memory_space<vmem>>) attributes {dimension_semantics = [#tpu.dimension_semantics<parallel>], iteration_bounds = array<i64: 1>, scalar_prefetch = 0 : i64, scratch_operands = 0 : i64, tpu.core_type = #tpu.core_type<tc>, window_params = [{transform_indices = @transform_0, window_bounds = array<i64: 4, 4>}, {pipeline_mode = #tpu.pipeline_mode<synchronous>, transform_indices = @transform_1, window_bounds = array<i64: 4, 128>}, {pipeline_mode = #tpu.pipeline_mode<synchronous>, transform_indices = @transform_2, window_bounds = array<i64: 1, 128>}, {transform_indices = @transform_3, window_bounds = array<i64: 4, 128>}]} {
    %c0 = arith.constant 0 : index
    %c0_0 = arith.constant 0 : index
    %0 = vector.load %arg1[%c0, %c0_0] : memref<4x4xi32, #tpu.memory_space<vmem>>, vector<4x4xi32>
    %1 = arith.sitofp %0 : vector<4x4xi32> to vector<4x4xf32>
    %c0_1 = arith.constant 0 : index
    %c0_2 = arith.constant 0 : index
    %2 = vector.load %arg3[%c0_1, %c0_2] : memref<1x128xf32, #tpu.memory_space<vmem>>, vector<1x128xf32>
    %3 = vector.extract_strided_slice %1 {offsets = [0, 0], sizes = [4, 1], strides = [1, 1]} : vector<4x4xf32> to vector<4x1xf32>
    %c0_3 = arith.constant 0 : index
    %c0_4 = arith.constant 0 : index
    %4 = vector.load %arg2[%c0_3, %c0_4] : memref<4x128xf32, #tpu.memory_space<vmem>>, vector<1x128xf32>
    %5 = vector.broadcast %3 : vector<4x1xf32> to vector<4x128xf32>
    %6 = vector.broadcast %4 : vector<1x128xf32> to vector<4x128xf32>
    %7 = arith.mulf %5, %6 : vector<4x128xf32>
    %8 = vector.broadcast %2 : vector<1x128xf32> to vector<4x128xf32>
    %9 = arith.addf %8, %7 : vector<4x128xf32>
    %10 = vector.extract_strided_slice %1 {offsets = [0, 1], sizes = [4, 1], strides = [1, 1]} : vector<4x4xf32> to vector<4x1xf32>
    %c1 = arith.constant 1 : index
    %c0_5 = arith.constant 0 : index
    %11 = vector.load %arg2[%c1, %c0_5] : memref<4x128xf32, #tpu.memory_space<vmem>>, vector<1x128xf32>
    %12 = vector.broadcast %10 : vector<4x1xf32> to vector<4x128xf32>
    %13 = vector.broadcast %11 : vector<1x128xf32> to vector<4x128xf32>
    %14 = arith.mulf %12, %13 : vector<4x128xf32>
    %15 = arith.addf %9, %14 : vector<4x128xf32>
    %16 = vector.extract_strided_slice %1 {offsets = [0, 2], sizes = [4, 1], strides = [1, 1]} : vector<4x4xf32> to vector<4x1xf32>
    %c2 = arith.constant 2 : index
    %c0_6 = arith.constant 0 : index
    %17 = vector.load %arg2[%c2, %c0_6] : memref<4x128xf32, #tpu.memory_space<vmem>>, vector<1x128xf32>
    %18 = vector.broadcast %16 : vector<4x1xf32> to vector<4x128xf32>
    %19 = vector.broadcast %17 : vector<1x128xf32> to vector<4x128xf32>
    %20 = arith.mulf %18, %19 : vector<4x128xf32>
    %21 = arith.addf %15, %20 : vector<4x128xf32>
    %22 = vector.extract_strided_slice %1 {offsets = [0, 3], sizes = [4, 1], strides = [1, 1]} : vector<4x4xf32> to vector<4x1xf32>
    %c3 = arith.constant 3 : index
    %c0_7 = arith.constant 0 : index
    %23 = vector.load %arg2[%c3, %c0_7] : memref<4x128xf32, #tpu.memory_space<vmem>>, vector<1x128xf32>
    %24 = vector.broadcast %22 : vector<4x1xf32> to vector<4x128xf32>
    %25 = vector.broadcast %23 : vector<1x128xf32> to vector<4x128xf32>
    %26 = arith.mulf %24, %25 : vector<4x128xf32>
    %27 = arith.addf %21, %26 : vector<4x128xf32>
    %28 = math.sin %27 : vector<4x128xf32>
    %c0_8 = arith.constant 0 : index
    %c0_9 = arith.constant 0 : index
    %29 = vector.load %arg4[%c0_8, %c0_9] : memref<4x128xf32, #tpu.memory_space<vmem>>, vector<4x128xf32>
    tpu.vector_store %arg4[%c0_8, %c0_9], %28 {strides = array<i32>} : memref<4x128xf32, #tpu.memory_space<vmem>>, vector<4x128xf32>,
    return
  }
  func.func @transform_0(%arg0: i32) -> (i32, i32) {
    %c0_i32 = arith.constant 0 : i32
    %c0_i32_0 = arith.constant 0 : i32
    return %arg0, %c0_i32 : i32, i32
  }
  func.func @transform_1(%arg0: i32) -> (i32, i32) {
    %c0_i32 = arith.constant 0 : i32
    %c0_i32_0 = arith.constant 0 : i32
    %c0_i32_1 = arith.constant 0 : i32
    return %c0_i32, %c0_i32_0 : i32, i32
  }
  func.func @transform_2(%arg0: i32) -> (i32, i32) {
    %c0_i32 = arith.constant 0 : i32
    %c0_i32_0 = arith.constant 0 : i32
    %c0_i32_1 = arith.constant 0 : i32
    return %c0_i32, %c0_i32_0 : i32, i32
  }
  func.func @transform_3(%arg0: i32) -> (i32, i32) {
    %c0_i32 = arith.constant 0 : i32
    %c0_i32_0 = arith.constant 0 : i32
    return %arg0, %c0_i32 : i32, i32
  }
}

</mosaic_0001>

<llo_original>
// kernel: tpu_custom_call.1
$region0: #{tpu_custom_call.1}
  #allocation0 [shape = 'u32[]', space=smem, size = 0x4, offset = 0x4, fixed_abs, tag = 'smem constant byte address 0x4 - core index']
  #allocation1 [shape = 'u32[144,128]{1,0:T(1,128)}', space=vmem, size = 0x12000, scoped, tag = 'internal scratch']
  %s0 = inlined_call_operand.hbm [shape: s32[4,4], index: 0, kind: input, shape index: {}]
  %s1 = inlined_call_operand.hbm [shape: f32[4,128], index: 1, kind: input, shape index: {}]
  %s2 = inlined_call_operand.vmem [shape: f32[1,128], index: 2, kind: input, shape index: {}]
  %s3 = inlined_call_operand.hbm [shape: f32[4,128], index: 3, kind: output, shape index: {}]
  %s4 = sld [smem:[#allocation0]]
  $region30: #{tpu_custom_call.1} parent=0
    _
  %s6 = ssub.s32 1, %s4
  %s7 = scalar_select 0, %s6, %s4
  $region1: #{tpu_custom_call.1} parent=0
    #allocation2 [shape = 'u8[2048]{0}', space=vmem, size = 0x800, scoped, tag = 'input window, operand 0, single buffered']
    #allocation3 [shape = 's32[1]{0}', space=sflag, size = 0x4, scoped, tag = 'scoped memory for tpu_custom_call.1']
    #allocation4 [shape = 's32[1]{0}', space=sflag, size = 0x4, scoped, tag = 'scoped memory for tpu_custom_call.1']
    #allocation5 [shape = 'u8[2048]{0}', space=vmem, size = 0x800, scoped, tag = 'input window, operand 1, single buffered']
    #allocation6 [shape = 's32[1]{0}', space=sflag, size = 0x4, scoped, tag = 'scoped memory for tpu_custom_call.1']
    #allocation7 [shape = 'u8[2048]{0}', space=vmem, size = 0x800, scoped, tag = 'output window, operand 0, single buffered']
    %8 = vsyncpa [#allocation3], 0
    %9 = vsyncpa [#allocation6], 0
    %10 = vsyncpa [#allocation4], 0
    // Predicated region
    $region2: #{tpu_custom_call.1} parent=1 // pred_check
      _
    $region3: #{tpu_custom_call.1} parent=1 // pred_check_branch
      %12 = sbr.rel (0) target = $region5
    $region4: #{tpu_custom_call.1} parent=1 // pred_region
      %s14 = ssub.s32 64, 64
      %15 = vsyncadd [#allocation3], %s14
      %s17 = sshll.u32 [#allocation2], 4
      %s18 = int_to_ptr.vmem [resolvable:$true] %s17
      %20 = dma.hbm_to_vmem [thread:$0]  %s0, 64, %s18, [#allocation3]
    $region5: #{tpu_custom_call.1} parent=1 // pred_fallthru
      _
    // Predicated region
    $region6: #{tpu_custom_call.1} parent=1 // pred_check
      _
    $region7: #{tpu_custom_call.1} parent=1 // pred_check_branch
      %22 = sbr.rel (0) target = $region9
    $region8: #{tpu_custom_call.1} parent=1 // pred_region
      %s24 = ssub.s32 64, 64
      %25 = vsyncadd [#allocation6], %s24
      %s27 = sshll.u32 [#allocation5], 4
      %s28 = int_to_ptr.vmem [resolvable:$true] %s27
      %30 = dma.hbm_to_vmem [thread:$0]  %s1, 64, %s28, [#allocation6]
    $region9: #{tpu_custom_call.1} parent=1 // pred_fallthru
      _
    // Predicated region
    $region10: #{tpu_custom_call.1} parent=1 // pred_check
      _
    $region11: #{tpu_custom_call.1} parent=1 // pred_check_branch
      %32 = sbr.rel (0) target = $region13
    $region12: #{tpu_custom_call.1} parent=1 // pred_region
      _
    $region13: #{tpu_custom_call.1} parent=1 // pred_fallthru
      _
    // Predicated region
    $region14: #{tpu_custom_call.1} parent=1 // pred_check
      _
    $region15: #{tpu_custom_call.1} parent=1 // pred_check_branch
      %34 = sbr.rel (0) target = $region17
    $region16: #{tpu_custom_call.1} parent=1 // pred_region
      %35 = dma.done [#allocation3], 64
    $region17: #{tpu_custom_call.1} parent=1 // pred_fallthru
      _
    // Predicated region
    $region18: #{tpu_custom_call.1} parent=1 // pred_check
      _
    $region19: #{tpu_custom_call.1} parent=1 // pred_check_branch
      %37 = sbr.rel (0) target = $region21
    $region20: #{tpu_custom_call.1} parent=1 // pred_region
      %38 = dma.done [#allocation6], 64
    $region21: #{tpu_custom_call.1} parent=1 // pred_fallthru
      _
    %v39 = vld [vmem:[#allocation2] sm:$0xf]
    %v40 = vcvt.s32.f32 %v39
    %v41 = vld [vmem:[%s2] sm:$0x1]
    %v42 = vld [vmem:[#allocation5] sm:$0x1]
    %44 = vset.pattern.permute.xlu0 0
    %45 = vperm.xlu0 %44, %v40
    %v46 = vpop.permute.xlu0 %45
    %v48 = vlaneseq
    %v49 = vshrl.u32 %v48, 7
    %v50 = vsub.s32 0, %v49
    %v51 = vrot.slane %v42, %v50
    %v52 = vmul.f32 %v46, %v51
    %v54 = vlaneseq
    %v55 = vshrl.u32 %v54, 7
    %v56 = vsub.s32 0, %v55
    %v57 = vrot.slane %v41, %v56
    %v59 = vadd.f32 %v57, %v52
    %v60 = vld [vmem:[#allocation5 + $0x1] sm:$0x1]
    %61 = vset.pattern.permute.xlu0 1
    %62 = vperm.xlu0 %61, %v40
    %v63 = vpop.permute.xlu0 %62
    %v65 = vlaneseq
    %v66 = vshrl.u32 %v65, 7
    %v67 = vsub.s32 0, %v66
    %v68 = vrot.slane %v60, %v67
    %v69 = vmul.f32 %v63, %v68
    %v70 = vadd.f32 %v59, %v69
    %v71 = vld [vmem:[#allocation5 + $0x2] sm:$0x1]
    %72 = vset.pattern.permute.xlu0 2
    %73 = vperm.xlu0 %72, %v40
    %v74 = vpop.permute.xlu0 %73
    %v76 = vlaneseq
    %v77 = vshrl.u32 %v76, 7
    %v78 = vsub.s32 0, %v77
    %v79 = vrot.slane %v71, %v78
    %v80 = vmul.f32 %v74, %v79
    %v81 = vadd.f32 %v70, %v80
    %v82 = vld [vmem:[#allocation5 + $0x3] sm:$0x1]
    %83 = vset.pattern.permute.xlu0 3
    %84 = vperm.xlu0 %83, %v40
    %v85 = vpop.permute.xlu0 %84
    %v87 = vlaneseq
    %v88 = vshrl.u32 %v87, 7
    %v89 = vsub.s32 0, %v88
    %v90 = vrot.slane %v82, %v89
    %v91 = vmul.f32 %v85, %v90
    %v92 = vadd.f32 %v81, %v91
    %v93 = vand.u32 2147483647, %v92
    %vm94 = vcmp.le.f32.partialorder %v93, 0.7853982
    %vm95 = vcmp.lt.s32.totalorder %v92, 0
    %v96 = vand.u32 %v92, 2139095040
    %v97 = vshrl.u32 %v96, 23
    %v98 = vsub.s32 %v97, 127
    %v99 = vand.u32 2147483647, %v92
    %v100 = vand.u32 %v99, 8388607
    %v101 = vor.u32 %v100, 8388608
    %v102 = vsub.s32 0, %v101
    %v103 = vadd.s32 %v98, 1
    %vm104 = vcmp.gt.s32.totalorder %v103, 0
    %v105 = vsel %vm104, %v103, 0
    %v106 = vshrl.u32 %v105, 5
    %v107 = vand.u32 %v105, 31
    %v108 = vsub.s32 32, %v107
    %v109 = vshrl.u32 683565275, %v108
    %v110 = vshll.u32 683565275, %v107
    %v111 = vshrl.u32 2475754826, %v108
    %v112 = vor.u32 %v110, %v111
    %v113 = vshll.u32 2475754826, %v107
    %v114 = vshrl.u32 2131351028, %v108
    %v115 = vor.u32 %v113, %v114
    %v116 = vshll.u32 2131351028, %v107
    %v117 = vshrl.u32 2102212464, %v108
    %v118 = vor.u32 %v116, %v117
    %v119 = vshll.u32 2102212464, %v107
    %v120 = vshrl.u32 920167782, %v108
    %v121 = vor.u32 %v119, %v120
    %v122 = vshll.u32 920167782, %v107
    %v123 = vshrl.u32 1326507024, %v108
    %v124 = vor.u32 %v122, %v123
    %vm125 = vcmp.lt.s32.totalorder %v106, 1
    %vm126 = vcmp.lt.s32.totalorder %v106, 2
    %vm127 = vcmp.lt.s32.totalorder %v106, 3
    %vm128 = vcmp.lt.s32.totalorder %v106, 4
    %v129 = vsel %vm125, %v109, %v112
    %v130 = vsel %vm128, %v118, 2102212464
    %v131 = vsel %vm127, %v115, %v130
    %v132 = vsel %vm126, %v129, %v131
    %v133 = vsel %vm125, %v112, %v115
    %v134 = vsel %vm128, %v121, 920167782
    %v135 = vsel %vm127, %v118, %v134
    %v136 = vsel %vm126, %v133, %v135
    %v137 = vsel %vm125, %v115, %v118
    %v138 = vsel %vm128, %v124, 1326507024
    %v139 = vsel %vm127, %v121, %v138
    %v140 = vsel %vm126, %v137, %v139
    %v141 = vshll.u32 %v101, 8
    %v142 = vmul.u32.u64.compose %v141, %v140
    %v143 = vextract.low.u32 %v142
    %v144 = vextract.high.u32 %v142
    %v145 = vmul.u32.u64.compose %v141, %v136
    %v146 = vextract.low.u32 %v145
    %v147 = vextract.high.u32 %v145
    %v148 = vmul.u32 %v141, %v132
    %v149 = vadd.s32 %v144, %v146
    %vm150 = vc.u32 %v144, %v146
    %v151 = vadd.s32 %v147, 1
    %v152 = vsel %vm150, %v151, %v147
    %v153 = vadd.s32 %v148, %v152
    %v154 = vadd.s32 %v153, 536870912
    %v155 = vshrl.u32 %v154, 30
    %v156 = vshll.u32 %v155, 30
    %v157 = vsub.s32 %v153, %v156
    %vm158 = vcmp.lt.s32.totalorder %v157, 0
    %v159 = vsub.s32 0, %v157
    %v160 = vsel %vm158, %v159, %v157
    %v161 = vclz %v160
    %v162 = vsub.s32 %v161, 2
    %vm163 = vcmp.gt.s32.totalorder 0, %v162
    %v164 = vsel %vm163, 0, %v162
    %v165 = vsub.s32 32, %v164
    %v166 = vshll.u32 %v157, %v164
    %v167 = vshrl.u32 %v149, %v165
    %v168 = vor.u32 %v166, %v167
    %v169 = vsub.s32 4294967266, %v164
    %v170 = vadd.s32 %v169, 127
    %v171 = vshll.u32 %v170, 23
    %v172 = vor.u32 4788187, %v171
    %v173 = vand.u32 2147483647, %v172
    %v175 = vcvt.s32.f32 %v168
    %v176 = vmul.f32 %v175, %v173
    %v177 = vxor.u32 %v176, 2147483648
    %v178 = vsel %vm95, %v177, %v176
    %v179 = vsub.s32 4, %v155
    %v180 = vsel %vm95, %v179, %v155
    %v181 = vsel %vm94, %v92, %v178
    %v182 = vsel %vm94, 0, %v180
    %v183 = vcosq.f32.pop %v181
    %v184 = vsinq.f32.pop %v181
    %vm185 = vweird.f32 %v92
    %v186 = vadd.s32 %v182, 3
    %v187 = vand.u32 %v186, 3
    %vm188 = vcmp.lt.s32.totalorder %v187, 2
    %vm189 = vcmp.eq.s32.totalorder %v187, 0
    %v190 = vxor.u32 %v184, 2147483648
    %v191 = vsel %vm189, %v183, %v190
    %vm192 = vcmp.eq.s32.totalorder %v187, 2
    %v193 = vxor.u32 %v183, 2147483648
    %v194 = vsel %vm192, %v193, %v184
    %v195 = vsel %vm188, %v191, %v194
    %v196 = vsel %vm185, nan, %v195
    %197 = vst [vmem:[#allocation7] sm:$0xf] %v196
    // Predicated region
    $region22: #{tpu_custom_call.1} parent=1 // pred_check
      _
    $region23: #{tpu_custom_call.1} parent=1 // pred_check_branch
      %199 = sbr.rel (0) target = $region25
    $region24: #{tpu_custom_call.1} parent=1 // pred_region
      %s201 = ssub.s32 64, 64
      %202 = vsyncadd [#allocation4], %s201
      %s204 = sshll.u32 [#allocation7], 4
      %s205 = int_to_ptr.vmem [resolvable:$true] %s204
      %207 = dma.vmem_to_hbm [thread:$0]  %s205, 64, %s3, [#allocation4]
    $region25: #{tpu_custom_call.1} parent=1 // pred_fallthru
      _
    // Predicated region
    $region26: #{tpu_custom_call.1} parent=1 // pred_check
      _
    $region27: #{tpu_custom_call.1} parent=1 // pred_check_branch
      %209 = sbr.rel (0) target = $region29
    $region28: #{tpu_custom_call.1} parent=1 // pred_region
      %210 = dma.done [#allocation4], 64
    $region29: #{tpu_custom_call.1} parent=1 // pred_fallthru
      _
    %211 = vsyncpa [#allocation3], 1
    %212 = vsyncpa [#allocation6], 1
    %213 = vsyncpa [#allocation4], 1

</llo_original>
